<compile_context>
chip_gen: v6e
topology: v6e:2x2x1
jax: 0.10.0
libtpu: 0.0.40
codegen_flags: <defaults>
</compile_context>

<pallas_src>
import jax
import jax.numpy as jnp
from jax.experimental import pallas as pl
from jax.experimental.pallas import tpu as pltpu

IN_FEATURES = 32          # len(df_features.columns[:-8]) -- synthetic choice
HIDDEN = (128, 256, 512, 256, 128)
OUT_FEATURES = 1

MAX_TILE = 2048           # batch-tile cap (VMEM-safe at 32 MiB scoped on all gens)


def _round_up(v, m):
    return (v + m - 1) // m * m


def _cdiv(a, b):
    return -(-a // b)


def _choose_tile(batch):
    """Pick the batch tile.

    Small batches: one tile, rounded to a multiple of 16 (bf16 packs 2 rows /
    sublane).  Larger batches: at least two tiles (v7x megacore), MXU-aligned
    to 256, capped at MAX_TILE so per-grid-step overhead is amortized while
    staying well inside VMEM on v5e/v6e/v7x.
    """
    if batch <= 256:
        return max(16, _round_up(batch, 16))
    return min(MAX_TILE, _round_up(_cdiv(batch, 2), 256))


def _mlp_kernel(x_ref,
                w1_ref, b1_ref,
                w2_ref, b2_ref,
                w3_ref, b3_ref,
                w4_ref, b4_ref,
                w5_ref, b5_ref,
                wo_ref, bo_ref,
                o_ref):
    """Fused 6-layer MLP forward for one batch tile.

    x_ref: (TB, IN) f32 (cast to bf16 in-kernel), hidden weights (in,out) bf16,
    biases (1,out) f32, final weight in PyTorch (out=1, in=128) orientation.
    Output block is a lane-dense (1, TB) f32 row.
    """
    h = x_ref[...].astype(jnp.bfloat16)

    def dense_relu(h, w_ref, b_ref):
        y = jnp.dot(h, w_ref[...], preferred_element_type=jnp.float32) + b_ref[...]
        return jnp.maximum(y, 0.0).astype(jnp.bfloat16)

    h = dense_relu(h, w1_ref, b1_ref)
    h = dense_relu(h, w2_ref, b2_ref)
    h = dense_relu(h, w3_ref, b3_ref)
    h = dense_relu(h, w4_ref, b4_ref)
    h = dense_relu(h, w5_ref, b5_ref)

    # Final Linear(128 -> 1): contract the feature dim of both operands
    # (q @ k.T style) so the result is directly a lane-dense (1, TB) row --
    # no oversized output slab, no transpose of the activations.
    out_row = jax.lax.dot_general(
        wo_ref[...], h,
        dimension_numbers=(((1,), (1,)), ((), ())),
        preferred_element_type=jnp.float32)          # (1, TB)
    o_ref[...] = out_row + bo_ref[...]               # + scalar bias (1,1)


@jax.jit
def mlp_forward(x, params):
    """x: (batch, IN_FEATURES) f32. params: list of (W(in,out) f32, b(1,out) f32)."""
    batch, in_f = x.shape

    tb = _choose_tile(batch)
    padded_batch = _round_up(batch, tb)
    if padded_batch != batch:
        x = jnp.pad(x, ((0, padded_batch - batch), (0, 0)))   # f32 row pad only

    flat = []
    # Raw f32 input: (tb, in_f) block -- last dim equals the full array dim.
    in_specs = [pl.BlockSpec((tb, in_f), lambda i: (i, 0))]
    n_layers = len(params)
    for li, (w, b) in enumerate(params):
        if li == n_layers - 1:
            wq = w.T.astype(jnp.bfloat16)    # (1, 128): PyTorch (out,in) orientation
            bq = b.astype(jnp.float32)       # (1, 1)
        else:
            wq = w.astype(jnp.bfloat16)      # (in, out)
            bq = b.astype(jnp.float32)       # (1, out)
        flat += [wq, bq]
        # Constant index_map -> weights/biases stay resident in VMEM across tiles.
        in_specs += [pl.BlockSpec(wq.shape, lambda i: (0, 0)),
                     pl.BlockSpec(bq.shape, lambda i: (0, 0))]

    num_tiles = padded_batch // tb
    out_row = pl.pallas_call(
        _mlp_kernel,
        out_shape=jax.ShapeDtypeStruct((1, padded_batch), jnp.float32),
        grid=(num_tiles,),
        in_specs=in_specs,
        out_specs=pl.BlockSpec((1, tb), lambda i: (0, i)),
        compiler_params=pltpu.CompilerParams(
            dimension_semantics=("parallel",),       # shard batch tiles across TCs
            vmem_limit_bytes=32 * 1024 * 1024,       # covers tb=2048 on v5e/v6e/v7x
        ),
    )(x, *flat)

    return out_row.reshape(padded_batch, 1)[:batch]


def init_params(key):
    """Deterministic PyTorch-style init (U(-1/sqrt(fan_in), 1/sqrt(fan_in))).

    PyTorch Linear stores weight as (out, in); we keep (in, out) here so the
    kernel hot path is x @ W + b (the last layer is re-transposed in the wrapper).
    """
    dims = (IN_FEATURES,) + HIDDEN + (OUT_FEATURES,)
    params = []
    for i in range(len(dims) - 1):
        fan_in, fan_out = dims[i], dims[i + 1]
        key, kw, kb = jax.random.split(key, 3)
        bound = 1.0 / jnp.sqrt(fan_in)
        w_pt = jax.random.uniform(kw, (fan_out, fan_in), jnp.float32, -bound, bound)
        b_pt = jax.random.uniform(kb, (fan_out,), jnp.float32, -bound, bound)
        params.append((w_pt.T, b_pt.reshape(1, fan_out)))
    return params


def reference_forward_f32(x, params):
    """Pure f32 reference (matches the PyTorch module in eval mode)."""
    h = x
    for i, (w, b) in enumerate(params):
        h = h @ w + b
        if i < len(params) - 1:
            h = jnp.maximum(h, 0.0)
    return h


def reference_forward_bf16(x, params):
    """Reference with the same bf16-input / f32-accumulation numerics as the kernel."""
    h = x.astype(jnp.bfloat16)
    n = len(params)
    y = None
    for i, (w, b) in enumerate(params):
        y = jnp.dot(h, w.astype(jnp.bfloat16),
                    preferred_element_type=jnp.float32) + b
        if i < n - 1:
            h = jnp.maximum(y, 0.0).astype(jnp.bfloat16)
    return y


if __name__ == "__main__":
    key = jax.random.PRNGKey(0)
    key, kx1, kx2 = jax.random.split(key, 3)
    params = init_params(key)

    # Small-shape check (single-tile path).
    batch = 8
    x = jax.random.normal(kx1, (batch, IN_FEATURES), dtype=jnp.float32)
    out = jax.block_until_ready(mlp_forward(x, params))
    assert out.shape == (batch, OUT_FEATURES), out.shape
    ref_q = reference_forward_bf16(x, params)
    ref_f = reference_forward_f32(x, params)
    assert jnp.allclose(out, ref_q, atol=1e-4, rtol=1e-4), "mismatch vs bf16 reference"
    assert jnp.allclose(out, ref_f, atol=2e-2, rtol=2e-2), "mismatch vs f32 reference"

    # Larger batch exercises the multi-tile (grid=2) path with row padding.
    batch2 = 400
    x2 = jax.random.normal(kx2, (batch2, IN_FEATURES), dtype=jnp.float32)
    out2 = jax.block_until_ready(mlp_forward(x2, params))
    assert out2.shape == (batch2, OUT_FEATURES), out2.shape
    ref2_q = reference_forward_bf16(x2, params)
    assert jnp.allclose(out2, ref2_q, atol=1e-4, rtol=1e-4), "mismatch vs bf16 reference (tiled)"

    print("KERNEL_OK")
</pallas_src>

<mosaic_0001>
module attributes {stable_mosaic.version = 11 : i64} {
  func.func @_mlp_kernel(%arg0: i32, %arg1: memref<16x32xf32, #tpu.memory_space<vmem>>, %arg2: memref<32x128xbf16, #tpu.memory_space<vmem>>, %arg3: memref<1x128xf32, #tpu.memory_space<vmem>>, %arg4: memref<128x256xbf16, #tpu.memory_space<vmem>>, %arg5: memref<1x256xf32, #tpu.memory_space<vmem>>, %arg6: memref<256x512xbf16, #tpu.memory_space<vmem>>, %arg7: memref<1x512xf32, #tpu.memory_space<vmem>>, %arg8: memref<512x256xbf16, #tpu.memory_space<vmem>>, %arg9: memref<1x256xf32, #tpu.memory_space<vmem>>, %arg10: memref<256x128xbf16, #tpu.memory_space<vmem>>, %arg11: memref<1x128xf32, #tpu.memory_space<vmem>>, %arg12: memref<1x128xbf16, #tpu.memory_space<vmem>>, %arg13: memref<1x1xf32, #tpu.memory_space<vmem>>, %arg14: memref<1x16xf32, #tpu.memory_space<vmem>>) attributes {dimension_semantics = [#tpu.dimension_semantics<parallel>], iteration_bounds = array<i64: 1>, scalar_prefetch = 0 : i64, scratch_operands = 0 : i64, tpu.core_type = #tpu.core_type<tc>, window_params = [{transform_indices = @transform_0, window_bounds = array<i64: 16, 32>}, {pipeline_mode = #tpu.pipeline_mode<synchronous>, transform_indices = @transform_1, window_bounds = array<i64: 32, 128>}, {pipeline_mode = #tpu.pipeline_mode<synchronous>, transform_indices = @transform_2, window_bounds = array<i64: 1, 128>}, {pipeline_mode = #tpu.pipeline_mode<synchronous>, transform_indices = @transform_3, window_bounds = array<i64: 128, 256>}, {pipeline_mode = #tpu.pipeline_mode<synchronous>, transform_indices = @transform_4, window_bounds = array<i64: 1, 256>}, {pipeline_mode = #tpu.pipeline_mode<synchronous>, transform_indices = @transform_5, window_bounds = array<i64: 256, 512>}, {pipeline_mode = #tpu.pipeline_mode<synchronous>, transform_indices = @transform_6, window_bounds = array<i64: 1, 512>}, {pipeline_mode = #tpu.pipeline_mode<synchronous>, transform_indices = @transform_7, window_bounds = array<i64: 512, 256>}, {pipeline_mode = #tpu.pipeline_mode<synchronous>, transform_indices = @transform_8, window_bounds = array<i64: 1, 256>}, {pipeline_mode = #tpu.pipeline_mode<synchronous>, transform_indices = @transform_9, window_bounds = array<i64: 256, 128>}, {pipeline_mode = #tpu.pipeline_mode<synchronous>, transform_indices = @transform_10, window_bounds = array<i64: 1, 128>}, {pipeline_mode = #tpu.pipeline_mode<synchronous>, transform_indices = @transform_11, window_bounds = array<i64: 1, 128>}, {pipeline_mode = #tpu.pipeline_mode<synchronous>, transform_indices = @transform_12, window_bounds = array<i64: 1, 1>}, {transform_indices = @transform_13, window_bounds = array<i64: 1, 16>}]} {
    %c0 = arith.constant 0 : index
    %c0_0 = arith.constant 0 : index
    %0 = vector.load %arg1[%c0, %c0_0] : memref<16x32xf32, #tpu.memory_space<vmem>>, vector<16x32xf32>
    %1 = arith.truncf %0 : vector<16x32xf32> to vector<16x32xbf16>
    %c0_1 = arith.constant 0 : index
    %c0_2 = arith.constant 0 : index
    %2 = vector.load %arg2[%c0_1, %c0_2] : memref<32x128xbf16, #tpu.memory_space<vmem>>, vector<32x128xbf16>
    %cst = arith.constant dense<0.000000e+00> : vector<16x128xf32>
    %3 = tpu.matmul %1, %2, %cst {dimension_numbers = #tpu.dot_dimension_numbers<[1], [0], [0], [1], [0, 0, 1, 1], [], []>} : vector<16x32xbf16>, vector<32x128xbf16>, vector<16x128xf32> -> vector<16x128xf32>
    %c0_3 = arith.constant 0 : index
    %c0_4 = arith.constant 0 : index
    %4 = vector.load %arg3[%c0_3, %c0_4] : memref<1x128xf32, #tpu.memory_space<vmem>>, vector<1x128xf32>
    %5 = vector.broadcast %4 : vector<1x128xf32> to vector<16x128xf32>
    %6 = arith.addf %3, %5 : vector<16x128xf32>
    %cst_5 = arith.constant 0.000000e+00 : f32
    %7 = vector.broadcast %cst_5 : f32 to vector<16x128xf32>
    %8 = arith.maximumf %6, %7 : vector<16x128xf32>
    %9 = arith.truncf %8 : vector<16x128xf32> to vector<16x128xbf16>
    %c0_6 = arith.constant 0 : index
    %c0_7 = arith.constant 0 : index
    %10 = vector.load %arg4[%c0_6, %c0_7] : memref<128x256xbf16, #tpu.memory_space<vmem>>, vector<128x256xbf16>
    %cst_8 = arith.constant dense<0.000000e+00> : vector<16x256xf32>
    %11 = tpu.matmul %9, %10, %cst_8 {dimension_numbers = #tpu.dot_dimension_numbers<[1], [0], [0], [1], [0, 0, 1, 1], [], []>} : vector<16x128xbf16>, vector<128x256xbf16>, vector<16x256xf32> -> vector<16x256xf32>
    %c0_9 = arith.constant 0 : index
    %c0_10 = arith.constant 0 : index
    %12 = vector.load %arg5[%c0_9, %c0_10] : memref<1x256xf32, #tpu.memory_space<vmem>>, vector<1x256xf32>
    %13 = vector.broadcast %12 : vector<1x256xf32> to vector<16x256xf32>
    %14 = arith.addf %11, %13 : vector<16x256xf32>
    %cst_11 = arith.constant 0.000000e+00 : f32
    %15 = vector.broadcast %cst_11 : f32 to vector<16x256xf32>
    %16 = arith.maximumf %14, %15 : vector<16x256xf32>
    %17 = arith.truncf %16 : vector<16x256xf32> to vector<16x256xbf16>
    %c0_12 = arith.constant 0 : index
    %c0_13 = arith.constant 0 : index
    %18 = vector.load %arg6[%c0_12, %c0_13] : memref<256x512xbf16, #tpu.memory_space<vmem>>, vector<256x512xbf16>
    %cst_14 = arith.constant dense<0.000000e+00> : vector<16x512xf32>
    %19 = tpu.matmul %17, %18, %cst_14 {dimension_numbers = #tpu.dot_dimension_numbers<[1], [0], [0], [1], [0, 0, 1, 1], [], []>} : vector<16x256xbf16>, vector<256x512xbf16>, vector<16x512xf32> -> vector<16x512xf32>
    %c0_15 = arith.constant 0 : index
    %c0_16 = arith.constant 0 : index
    %20 = vector.load %arg7[%c0_15, %c0_16] : memref<1x512xf32, #tpu.memory_space<vmem>>, vector<1x512xf32>
    %21 = vector.broadcast %20 : vector<1x512xf32> to vector<16x512xf32>
    %22 = arith.addf %19, %21 : vector<16x512xf32>
    %cst_17 = arith.constant 0.000000e+00 : f32
    %23 = vector.broadcast %cst_17 : f32 to vector<16x512xf32>
    %24 = arith.maximumf %22, %23 : vector<16x512xf32>
    %25 = arith.truncf %24 : vector<16x512xf32> to vector<16x512xbf16>
    %c0_18 = arith.constant 0 : index
    %c0_19 = arith.constant 0 : index
    %26 = vector.load %arg8[%c0_18, %c0_19] : memref<512x256xbf16, #tpu.memory_space<vmem>>, vector<512x256xbf16>
    %cst_20 = arith.constant dense<0.000000e+00> : vector<16x256xf32>
    %27 = tpu.matmul %25, %26, %cst_20 {dimension_numbers = #tpu.dot_dimension_numbers<[1], [0], [0], [1], [0, 0, 1, 1], [], []>} : vector<16x512xbf16>, vector<512x256xbf16>, vector<16x256xf32> -> vector<16x256xf32>
    %c0_21 = arith.constant 0 : index
    %c0_22 = arith.constant 0 : index
    %28 = vector.load %arg9[%c0_21, %c0_22] : memref<1x256xf32, #tpu.memory_space<vmem>>, vector<1x256xf32>
    %29 = vector.broadcast %28 : vector<1x256xf32> to vector<16x256xf32>
    %30 = arith.addf %27, %29 : vector<16x256xf32>
    %cst_23 = arith.constant 0.000000e+00 : f32
    %31 = vector.broadcast %cst_23 : f32 to vector<16x256xf32>
    %32 = arith.maximumf %30, %31 : vector<16x256xf32>
    %33 = arith.truncf %32 : vector<16x256xf32> to vector<16x256xbf16>
    %c0_24 = arith.constant 0 : index
    %c0_25 = arith.constant 0 : index
    %34 = vector.load %arg10[%c0_24, %c0_25] : memref<256x128xbf16, #tpu.memory_space<vmem>>, vector<256x128xbf16>
    %cst_26 = arith.constant dense<0.000000e+00> : vector<16x128xf32>
    %35 = tpu.matmul %33, %34, %cst_26 {dimension_numbers = #tpu.dot_dimension_numbers<[1], [0], [0], [1], [0, 0, 1, 1], [], []>} : vector<16x256xbf16>, vector<256x128xbf16>, vector<16x128xf32> -> vector<16x128xf32>
    %c0_27 = arith.constant 0 : index
    %c0_28 = arith.constant 0 : index
    %36 = vector.load %arg11[%c0_27, %c0_28] : memref<1x128xf32, #tpu.memory_space<vmem>>, vector<1x128xf32>
    %37 = vector.broadcast %36 : vector<1x128xf32> to vector<16x128xf32>
    %38 = arith.addf %35, %37 : vector<16x128xf32>
    %cst_29 = arith.constant 0.000000e+00 : f32
    %39 = vector.broadcast %cst_29 : f32 to vector<16x128xf32>
    %40 = arith.maximumf %38, %39 : vector<16x128xf32>
    %41 = arith.truncf %40 : vector<16x128xf32> to vector<16x128xbf16>
    %c0_30 = arith.constant 0 : index
    %c0_31 = arith.constant 0 : index
    %42 = vector.load %arg12[%c0_30, %c0_31] : memref<1x128xbf16, #tpu.memory_space<vmem>>, vector<1x128xbf16>
    %cst_32 = arith.constant dense<0.000000e+00> : vector<1x16xf32>
    %43 = tpu.matmul %42, %41, %cst_32 {dimension_numbers = #tpu.dot_dimension_numbers<[1], [1], [0], [0], [0, 0, 1, 0], [], []>} : vector<1x128xbf16>, vector<16x128xbf16>, vector<1x16xf32> -> vector<1x16xf32>
    %c0_33 = arith.constant 0 : index
    %c0_34 = arith.constant 0 : index
    %44 = vector.load %arg13[%c0_33, %c0_34] : memref<1x1xf32, #tpu.memory_space<vmem>>, vector<1x1xf32>
    %45 = vector.broadcast %44 : vector<1x1xf32> to vector<1x16xf32>
    %46 = arith.addf %43, %45 : vector<1x16xf32>
    %c0_35 = arith.constant 0 : index
    %c0_36 = arith.constant 0 : index
    %47 = vector.load %arg14[%c0_35, %c0_36] : memref<1x16xf32, #tpu.memory_space<vmem>>, vector<1x16xf32>
    tpu.vector_store %arg14[%c0_35, %c0_36], %46 {strides = array<i32>} : memref<1x16xf32, #tpu.memory_space<vmem>>, vector<1x16xf32>,
    return
  }
  func.func @transform_0(%arg0: i32) -> (i32, i32) {
    %c0_i32 = arith.constant 0 : i32
    %c0_i32_0 = arith.constant 0 : i32
    return %arg0, %c0_i32 : i32, i32
  }
  func.func @transform_1(%arg0: i32) -> (i32, i32) {
    %c0_i32 = arith.constant 0 : i32
    %c0_i32_0 = arith.constant 0 : i32
    %c0_i32_1 = arith.constant 0 : i32
    return %c0_i32, %c0_i32_0 : i32, i32
  }
  func.func @transform_2(%arg0: i32) -> (i32, i32) {
    %c0_i32 = arith.constant 0 : i32
    %c0_i32_0 = arith.constant 0 : i32
    %c0_i32_1 = arith.constant 0 : i32
    return %c0_i32, %c0_i32_0 : i32, i32
  }
  func.func @transform_3(%arg0: i32) -> (i32, i32) {
    %c0_i32 = arith.constant 0 : i32
    %c0_i32_0 = arith.constant 0 : i32
    %c0_i32_1 = arith.constant 0 : i32
    return %c0_i32, %c0_i32_0 : i32, i32
  }
  func.func @transform_4(%arg0: i32) -> (i32, i32) {
    %c0_i32 = arith.constant 0 : i32
    %c0_i32_0 = arith.constant 0 : i32
    %c0_i32_1 = arith.constant 0 : i32
    return %c0_i32, %c0_i32_0 : i32, i32
  }
  func.func @transform_5(%arg0: i32) -> (i32, i32) {
    %c0_i32 = arith.constant 0 : i32
    %c0_i32_0 = arith.constant 0 : i32
    %c0_i32_1 = arith.constant 0 : i32
    return %c0_i32, %c0_i32_0 : i32, i32
  }
  func.func @transform_6(%arg0: i32) -> (i32, i32) {
    %c0_i32 = arith.constant 0 : i32
    %c0_i32_0 = arith.constant 0 : i32
    %c0_i32_1 = arith.constant 0 : i32
    return %c0_i32, %c0_i32_0 : i32, i32
  }
  func.func @transform_7(%arg0: i32) -> (i32, i32) {
    %c0_i32 = arith.constant 0 : i32
    %c0_i32_0 = arith.constant 0 : i32
    %c0_i32_1 = arith.constant 0 : i32
    return %c0_i32, %c0_i32_0 : i32, i32
  }
  func.func @transform_8(%arg0: i32) -> (i32, i32) {
    %c0_i32 = arith.constant 0 : i32
    %c0_i32_0 = arith.constant 0 : i32
    %c0_i32_1 = arith.constant 0 : i32
    return %c0_i32, %c0_i32_0 : i32, i32
  }
  func.func @transform_9(%arg0: i32) -> (i32, i32) {
    %c0_i32 = arith.constant 0 : i32
    %c0_i32_0 = arith.constant 0 : i32
    %c0_i32_1 = arith.constant 0 : i32
    return %c0_i32, %c0_i32_0 : i32, i32
  }
  func.func @transform_10(%arg0: i32) -> (i32, i32) {
    %c0_i32 = arith.constant 0 : i32
    %c0_i32_0 = arith.constant 0 : i32
    %c0_i32_1 = arith.constant 0 : i32
    return %c0_i32, %c0_i32_0 : i32, i32
  }
  func.func @transform_11(%arg0: i32) -> (i32, i32) {
    %c0_i32 = arith.constant 0 : i32
    %c0_i32_0 = arith.constant 0 : i32
    %c0_i32_1 = arith.constant 0 : i32
    return %c0_i32, %c0_i32_0 : i32, i32
  }
  func.func @transform_12(%arg0: i32) -> (i32, i32) {
    %c0_i32 = arith.constant 0 : i32
    %c0_i32_0 = arith.constant 0 : i32
    %c0_i32_1 = arith.constant 0 : i32
    return %c0_i32, %c0_i32_0 : i32, i32
  }
  func.func @transform_13(%arg0: i32) -> (i32, i32) {
    %c0_i32 = arith.constant 0 : i32
    %c0_i32_0 = arith.constant 0 : i32
    return %c0_i32, %arg0 : i32, i32
  }
}

</mosaic_0001>

<llo_original>
// kernel: mlp_forward.1
$region0: #{mlp_forward.1}
  #allocation0 [shape = 'u32[]', space=smem, size = 0x4, offset = 0x4, fixed_abs, tag = 'smem constant byte address 0x4 - core index']
  #allocation1 [shape = 'u32[144,128]{1,0:T(1,128)}', space=vmem, size = 0x12000, scoped, tag = 'internal scratch']
  #allocation2 [shape = 'f32[1,1]{1,0:T(1,128)S(1)}', space=vmem, size = 0x200, scoped, tag = 'scoped memory for mlp_forward.1']
  %s0 = inlined_call_operand.vmem [shape: f32[16,32], index: 0, kind: input, shape index: {}]
  %s1 = inlined_call_operand.vmem [shape: bf16[32,128], index: 1, kind: input, shape index: {}]
  %s2 = inlined_call_operand.vmem [shape: f32[1,128], index: 2, kind: input, shape index: {}]
  %s3 = inlined_call_operand.vmem [shape: bf16[128,256], index: 3, kind: input, shape index: {}]
  %s4 = inlined_call_operand.vmem [shape: f32[1,256], index: 4, kind: input, shape index: {}]
  %s5 = inlined_call_operand.vmem [shape: bf16[256,512], index: 5, kind: input, shape index: {}]
  %s6 = inlined_call_operand.vmem [shape: f32[1,512], index: 6, kind: input, shape index: {}]
  %s7 = inlined_call_operand.vmem [shape: bf16[512,256], index: 7, kind: input, shape index: {}]
  %s8 = inlined_call_operand.vmem [shape: f32[1,256], index: 8, kind: input, shape index: {}]
  %s9 = inlined_call_operand.vmem [shape: bf16[256,128], index: 9, kind: input, shape index: {}]
  %s10 = inlined_call_operand.vmem [shape: f32[1,128], index: 10, kind: input, shape index: {}]
  %s11 = inlined_call_operand.vmem [shape: bf16[1,128], index: 11, kind: input, shape index: {}]
  %s12 = inlined_call_operand.<no memory space> [shape: f32[1,1], index: 12, kind: input, shape index: {}]
  %s13 = inlined_call_operand.vmem [shape: f32[1,16], index: 13, kind: output, shape index: {}]
  %s14 = sld [smem:[#allocation0]]
  $region62: #{mlp_forward.1} parent=0
    _
  %s16 = ssub.s32 1, %s14
  %s17 = scalar_select 0, %s16, %s14
  %v18 = vstv %s12
  %19 = vst [vmem:[#allocation2] sm:$0x1] %v18
  // Predicated region
  $region2: #{mlp_forward.1} parent=0 // pred_check
    _
  $region3: #{mlp_forward.1} parent=0 // pred_check_branch
    %21 = sbr.rel (0) target = $region5
  $region4: #{mlp_forward.1} parent=0 // pred_region
    _
  $region5: #{mlp_forward.1} parent=0 // pred_fallthru
    _
  // Predicated region
  $region6: #{mlp_forward.1} parent=0 // pred_check
    _
  $region7: #{mlp_forward.1} parent=0 // pred_check_branch
    %23 = sbr.rel (0) target = $region9
  $region8: #{mlp_forward.1} parent=0 // pred_region
    _
  $region9: #{mlp_forward.1} parent=0 // pred_fallthru
    _
  // Predicated region
  $region10: #{mlp_forward.1} parent=0 // pred_check
    _
  $region11: #{mlp_forward.1} parent=0 // pred_check_branch
    %25 = sbr.rel (0) target = $region13
  $region12: #{mlp_forward.1} parent=0 // pred_region
    _
  $region13: #{mlp_forward.1} parent=0 // pred_fallthru
    _
  // Predicated region
  $region14: #{mlp_forward.1} parent=0 // pred_check
    _
  $region15: #{mlp_forward.1} parent=0 // pred_check_branch
    %27 = sbr.rel (0) target = $region17
  $region16: #{mlp_forward.1} parent=0 // pred_region
    _
  $region17: #{mlp_forward.1} parent=0 // pred_fallthru
    _
  // Predicated region
  $region18: #{mlp_forward.1} parent=0 // pred_check
    _
  $region19: #{mlp_forward.1} parent=0 // pred_check_branch
    %29 = sbr.rel (0) target = $region21
  $region20: #{mlp_forward.1} parent=0 // pred_region
    _
  $region21: #{mlp_forward.1} parent=0 // pred_fallthru
    _
  // Predicated region
  $region22: #{mlp_forward.1} parent=0 // pred_check
    _
  $region23: #{mlp_forward.1} parent=0 // pred_check_branch
    %31 = sbr.rel (0) target = $region25
  $region24: #{mlp_forward.1} parent=0 // pred_region
    _
  $region25: #{mlp_forward.1} parent=0 // pred_fallthru
    _
  // Predicated region
  $region26: #{mlp_forward.1} parent=0 // pred_check
    _
  $region27: #{mlp_forward.1} parent=0 // pred_check_branch
    %33 = sbr.rel (0) target = $region29
  $region28: #{mlp_forward.1} parent=0 // pred_region
    _
  $region29: #{mlp_forward.1} parent=0 // pred_fallthru
    _
  // Predicated region
  $region30: #{mlp_forward.1} parent=0 // pred_check
    _
  $region31: #{mlp_forward.1} parent=0 // pred_check_branch
    %35 = sbr.rel (0) target = $region33
  $region32: #{mlp_forward.1} parent=0 // pred_region
    _
  $region33: #{mlp_forward.1} parent=0 // pred_fallthru
    _
  // Predicated region
  $region34: #{mlp_forward.1} parent=0 // pred_check
    _
  $region35: #{mlp_forward.1} parent=0 // pred_check_branch
    %37 = sbr.rel (0) target = $region37
  $region36: #{mlp_forward.1} parent=0 // pred_region
    _
  $region37: #{mlp_forward.1} parent=0 // pred_fallthru
    _
  // Predicated region
  $region38: #{mlp_forward.1} parent=0 // pred_check
    _
  $region39: #{mlp_forward.1} parent=0 // pred_check_branch
    %39 = sbr.rel (0) target = $region41
  $region40: #{mlp_forward.1} parent=0 // pred_region
    _
  $region41: #{mlp_forward.1} parent=0 // pred_fallthru
    _
  // Predicated region
  $region42: #{mlp_forward.1} parent=0 // pred_check
    _
  $region43: #{mlp_forward.1} parent=0 // pred_check_branch
    %41 = sbr.rel (0) target = $region45
  $region44: #{mlp_forward.1} parent=0 // pred_region
    _
  $region45: #{mlp_forward.1} parent=0 // pred_fallthru
    _
  // Predicated region
  $region46: #{mlp_forward.1} parent=0 // pred_check
    _
  $region47: #{mlp_forward.1} parent=0 // pred_check_branch
    %43 = sbr.rel (0) target = $region49
  $region48: #{mlp_forward.1} parent=0 // pred_region
    _
  $region49: #{mlp_forward.1} parent=0 // pred_fallthru
    _
  // Predicated region
  $region50: #{mlp_forward.1} parent=0 // pred_check
    _
  $region51: #{mlp_forward.1} parent=0 // pred_check_branch
    %45 = sbr.rel (0) target = $region53
  $region52: #{mlp_forward.1} parent=0 // pred_region
    _
  $region53: #{mlp_forward.1} parent=0 // pred_fallthru
    _
  %v47 = vld [vmem:[%s0] sm:$0xff]
  %v48 = vld [vmem:[%s0 + $0x8] sm:$0xff]
  %v49 = vpack.c.bf16 %v48, %v47
  %v50 = vld [vmem:[%s1] sm:$0xf]
  %v51 = vld [vmem:[%s1 + $0x4] sm:$0xf]
  %v52 = vld [vmem:[%s1 + $0x8] sm:$0xf]
  %v53 = vld [vmem:[%s1 + $0xc] sm:$0xf]
  %v54 = vld [vmem:[%s2] sm:$0x1]
  %v56 = vlaneseq
  %v57 = vshrl.u32 %v56, 7
  %v58 = vsub.s32 0, %v57
  %v59 = vrot.slane %v54, %v58
  %v65 = vunpack.c.l.b16 %v50
  %v66 = vunpack.c.l.b16 %v51
  %v67 = vunpack.c.l.b16 %v52
  %v68 = vunpack.c.l.b16 %v53
  %v69 = vpack.c.b16 %v66, %v65
  %v70 = vpack.c.b16 %v68, %v67
  %vm73 = vcmask 261120
  %v75 = vsel %vm73, %v49, 0
  %77 = vmatprep.subr.bf16.mxu0 0
  %78 = vmatpush1.bf16.msra.mxu0 0
  %79 = vmatprep.subr.bf16.mxu0 0
  %80 = vmatpush1.bf16.msra.mxu0 0
  %81 = vmatprep.subr.bf16.mxu0 0
  %82 = vmatpush1.bf16.msra.mxu0 0
  %83 = vmatprep.subr.bf16.mxu0 0
  %84 = vmatpush1.bf16.msra.mxu0 0
  %85 = vmatprep.subr.bf16.mxu0 0
  %86 = vmatpush1.bf16.msra.mxu0 0
  %87 = vmatprep.subr.bf16.mxu0 0
  %88 = vmatpush1.bf16.msra.mxu0 0
  %89 = vmatprep.subr.bf16.mxu0 0
  %90 = vmatpush1.bf16.msra.mxu0 %v70
  %91 = vmatprep.subr.bf16.mxu0 0
  %92 = vmatpush1.bf16.msra.mxu0 %v69
  %93 = vmatprep.subr.bf16.mxu0 0
  %94 = vmatpush2.bf16.msra.mxu0 0
  %95 = vmatprep.subr.bf16.mxu0 0
  %96 = vmatpush2.bf16.msra.mxu0 0
  %97 = vmatprep.subr.bf16.mxu0 0
  %98 = vmatpush2.bf16.msra.mxu0 0
  %99 = vmatprep.subr.bf16.mxu0 0
  %100 = vmatpush2.bf16.msra.mxu0 0
  %101 = vmatprep.subr.bf16.mxu0 0
  %102 = vmatpush2.bf16.msra.mxu0 0
  %103 = vmatprep.subr.bf16.mxu0 0
  %104 = vmatpush2.bf16.msra.mxu0 0
  %105 = vmatprep.subr.bf16.mxu0 0
  %106 = vmatpush2.bf16.msra.mxu0 0
  %107 = vmatprep.subr.bf16.mxu0 0
  %108 = vmatpush2.bf16.msra.mxu0 0
  %109 = vmatprep.mubr.bf16.mxu0 0
  %110 = vmatmul.mubr.bf16.gmra.mxu0 %v75
  %v111 = vpop.f32.mrf.mxu0
  %v112 = vadd.f32 %v59, %v111
  %v113 = vpop.f32.mrf.mxu0
  %v114 = vpop.f32.mrf.mxu0
  %v115 = vadd.f32 %v59, %v114
  %v116 = vpop.f32.mrf.mxu0
  %117 = vdwg.mxu0
  %v118 = vmax.f32 %v112, 0.0
  %v119 = vmax.f32 %v115, 0.0
  %v120 = vpack.c.bf16 %v119, %v118
  %v121 = vld [vmem:[%s3] sm:$0xff]
  %v122 = vld [vmem:[%s3 + $0x8] sm:$0xff]
  %v123 = vld [vmem:[%s3 + $0x10] sm:$0xff]
  %v124 = vld [vmem:[%s3 + $0x18] sm:$0xff]
  %v125 = vld [vmem:[%s3 + $0x20] sm:$0xff]
  %v126 = vld [vmem:[%s3 + $0x28] sm:$0xff]
  %v127 = vld [vmem:[%s3 + $0x30] sm:$0xff]
  %v128 = vld [vmem:[%s3 + $0x38] sm:$0xff]
  %v129 = vld [vmem:[%s3 + $0x40] sm:$0xff]
  %v130 = vld [vmem:[%s3 + $0x48] sm:$0xff]
  %v131 = vld [vmem:[%s3 + $0x50] sm:$0xff]
  %v132 = vld [vmem:[%s3 + $0x58] sm:$0xff]
  %v133 = vld [vmem:[%s3 + $0x60] sm:$0xff]
  %v134 = vld [vmem:[%s3 + $0x68] sm:$0xff]
  %v135 = vld [vmem:[%s3 + $0x70] sm:$0xff]
  %v136 = vld [vmem:[%s3 + $0x78] sm:$0xff]
  %v137 = vld [vmem:[%s4] sm:$0x3]
  %v139 = vlaneseq
  %v140 = vshrl.u32 %v139, 7
  %v141 = vsub.s32 0, %v140
  %v142 = vrot.slane %v137, %v141
  %v143 = vlaneseq
  %v144 = vshrl.u32 %v143, 7
  %v145 = vsub.s32 1, %v144
  %v146 = vrot.slane %v137, %v145
  %v165 = vunpack.c.l.b16 %v121
  %v166 = vunpack.c.h.b16 %v121
  %v167 = vunpack.c.l.b16 %v122
  %v168 = vunpack.c.h.b16 %v122
  %v169 = vunpack.c.l.b16 %v123
  %v170 = vunpack.c.h.b16 %v123
  %v171 = vunpack.c.l.b16 %v124
  %v172 = vunpack.c.h.b16 %v124
  %v173 = vunpack.c.l.b16 %v125
  %v174 = vunpack.c.h.b16 %v125
  %v175 = vunpack.c.l.b16 %v126
  %v176 = vunpack.c.h.b16 %v126
  %v177 = vunpack.c.l.b16 %v127
  %v178 = vunpack.c.h.b16 %v127
  %v179 = vunpack.c.l.b16 %v128
  %v180 = vunpack.c.h.b16 %v128
  %v181 = vunpack.c.l.b16 %v129
  %v182 = vunpack.c.h.b16 %v129
  %v183 = vunpack.c.l.b16 %v130
  %v184 = vunpack.c.h.b16 %v130
  %v185 = vunpack.c.l.b16 %v131
  %v186 = vunpack.c.h.b16 %v131
  %v187 = vunpack.c.l.b16 %v132
  %v188 = vunpack.c.h.b16 %v132
  %v189 = vunpack.c.l.b16 %v133
  %v190 = vunpack.c.h.b16 %v133
  %v191 = vunpack.c.l.b16 %v134
  %v192 = vunpack.c.h.b16 %v134
  %v193 = vunpack.c.l.b16 %v135
  %v194 = vunpack.c.h.b16 %v135
  %v195 = vunpack.c.l.b16 %v136
  %v196 = vunpack.c.h.b16 %v136
  %v197 = vpack.c.b16 %v167, %v165
  %v198 = vpack.c.b16 %v168, %v166
  %v199 = vpack.c.b16 %v171, %v169
  %v200 = vpack.c.b16 %v172, %v170
  %v201 = vpack.c.b16 %v175, %v173
  %v202 = vpack.c.b16 %v176, %v174
  %v203 = vpack.c.b16 %v179, %v177
  %v204 = vpack.c.b16 %v180, %v178
  %v205 = vpack.c.b16 %v183, %v181
  %v206 = vpack.c.b16 %v184, %v182
  %v207 = vpack.c.b16 %v187, %v185
  %v208 = vpack.c.b16 %v188, %v186
  %v209 = vpack.c.b16 %v191, %v189
  %v210 = vpack.c.b16 %v192, %v190
  %v211 = vpack.c.b16 %v195, %v193
  %v212 = vpack.c.b16 %v196, %v194
  %229 = vmatprep.subr.bf16.mxu0 %v212
  %230 = vmatpush1.bf16.msra.mxu0 %v211
  %231 = vmatprep.subr.bf16.mxu0 %v210
  %232 = vmatpush1.bf16.msra.mxu0 %v209
  %233 = vmatprep.subr.bf16.mxu0 %v208
  %234 = vmatpush1.bf16.msra.mxu0 %v207
  %235 = vmatprep.subr.bf16.mxu0 %v206
  %236 = vmatpush1.bf16.msra.mxu0 %v205
  %237 = vmatprep.subr.bf16.mxu0 %v204
  %238 = vmatpush1.bf16.msra.mxu0 %v203
  %239 = vmatprep.subr.bf16.mxu0 %v202
  %240 = vmatpush1.bf16.msra.mxu0 %v201
  %241 = vmatprep.subr.bf16.mxu0 %v200
  %242 = vmatpush1.bf16.msra.mxu0 %v199
  %243 = vmatprep.subr.bf16.mxu0 %v198
  %244 = vmatpush1.bf16.msra.mxu0 %v197
  %245 = vmatprep.subr.bf16.mxu0 0
  %246 = vmatpush2.bf16.msra.mxu0 0
  %247 = vmatprep.subr.bf16.mxu0 0
  %248 = vmatpush2.bf16.msra.mxu0 0
  %249 = vmatprep.subr.bf16.mxu0 0
  %250 = vmatpush2.bf16.msra.mxu0 0
  %251 = vmatprep.subr.bf16.mxu0 0
  %252 = vmatpush2.bf16.msra.mxu0 0
  %253 = vmatprep.subr.bf16.mxu0 0
  %254 = vmatpush2.bf16.msra.mxu0 0
  %255 = vmatprep.subr.bf16.mxu0 0
  %256 = vmatpush2.bf16.msra.mxu0 0
  %257 = vmatprep.subr.bf16.mxu0 0
  %258 = vmatpush2.bf16.msra.mxu0 0
  %259 = vmatprep.subr.bf16.mxu0 0
  %260 = vmatpush2.bf16.msra.mxu0 0
  %261 = vmatprep.mubr.bf16.mxu0 0
  %262 = vmatmul.mubr.bf16.gmra.mxu0 %v120
  %v263 = vpop.f32.mrf.mxu0
  %v264 = vadd.f32 %v142, %v263
  %v265 = vpop.f32.mrf.mxu0
  %v266 = vadd.f32 %v146, %v265
  %v267 = vpop.f32.mrf.mxu0
  %v268 = vadd.f32 %v142, %v267
  %v269 = vpop.f32.mrf.mxu0
  %v270 = vadd.f32 %v146, %v269
  %271 = vdwg.mxu0
  %v272 = vmax.f32 %v264, 0.0
  %v273 = vmax.f32 %v266, 0.0
  %v274 = vmax.f32 %v268, 0.0
  %v275 = vmax.f32 %v270, 0.0
  %v276 = vpack.c.bf16 %v274, %v272
  %v277 = vpack.c.bf16 %v275, %v273
  %v278 = vld [vmem:[%s5] sm:$0xff]
  %v279 = vld [vmem:[%s5 + $0x8] sm:$0xff]
  %v280 = vld [vmem:[%s5 + $0x10] sm:$0xff]
  %v281 = vld [vmem:[%s5 + $0x18] sm:$0xff]
  %v282 = vld [vmem:[%s5 + $0x20] sm:$0xff]
  %v283 = vld [vmem:[%s5 + $0x28] sm:$0xff]
  %v284 = vld [vmem:[%s5 + $0x30] sm:$0xff]
  %v285 = vld [vmem:[%s5 + $0x38] sm:$0xff]
  %v286 = vld [vmem:[%s5 + $0x40] sm:$0xff]
  %v287 = vld [vmem:[%s5 + $0x48] sm:$0xff]
  %v288 = vld [vmem:[%s5 + $0x50] sm:$0xff]
  %v289 = vld [vmem:[%s5 + $0x58] sm:$0xff]
  %v290 = vld [vmem:[%s5 + $0x60] sm:$0xff]
  %v291 = vld [vmem:[%s5 + $0x68] sm:$0xff]
  %v292 = vld [vmem:[%s5 + $0x70] sm:$0xff]
  %v293 = vld [vmem:[%s5 + $0x78] sm:$0xff]
  %v294 = vld [vmem:[%s5 + $0x80] sm:$0xff]
  %v295 = vld [vmem:[%s5 + $0x88] sm:$0xff]
  %v296 = vld [vmem:[%s5 + $0x90] sm:$0xff]
  %v297 = vld [vmem:[%s5 + $0x98] sm:$0xff]
  %v298 = vld [vmem:[%s5 + $0xa0] sm:$0xff]
  %v299 = vld [vmem:[%s5 + $0xa8] sm:$0xff]
  %v300 = vld [vmem:[%s5 + $0xb0] sm:$0xff]
  %v301 = vld [vmem:[%s5 + $0xb8] sm:$0xff]
  %v302 = vld [vmem:[%s5 + $0xc0] sm:$0xff]
  %v303 = vld [vmem:[%s5 + $0xc8] sm:$0xff]
  %v304 = vld [vmem:[%s5 + $0xd0] sm:$0xff]
  %v305 = vld [vmem:[%s5 + $0xd8] sm:$0xff]
  %v306 = vld [vmem:[%s5 + $0xe0] sm:$0xff]
  %v307 = vld [vmem:[%s5 + $0xe8] sm:$0xff]
  %v308 = vld [vmem:[%s5 + $0xf0] sm:$0xff]
  %v309 = vld [vmem:[%s5 + $0xf8] sm:$0xff]
  %v310 = vld [vmem:[%s5 + $0x100] sm:$0xff]
  %v311 = vld [vmem:[%s5 + $0x108] sm:$0xff]
  %v312 = vld [vmem:[%s5 + $0x110] sm:$0xff]
  %v313 = vld [vmem:[%s5 + $0x118] sm:$0xff]
  %v314 = vld [vmem:[%s5 + $0x120] sm:$0xff]
  %v315 = vld [vmem:[%s5 + $0x128] sm:$0xff]
  %v316 = vld [vmem:[%s5 + $0x130] sm:$0xff]
  %v317 = vld [vmem:[%s5 + $0x138] sm:$0xff]
  %v318 = vld [vmem:[%s5 + $0x140] sm:$0xff]
  %v319 = vld [vmem:[%s5 + $0x148] sm:$0xff]
  %v320 = vld [vmem:[%s5 + $0x150] sm:$0xff]
  %v321 = vld [vmem:[%s5 + $0x158] sm:$0xff]
  %v322 = vld [vmem:[%s5 + $0x160] sm:$0xff]
  %v323 = vld [vmem:[%s5 + $0x168] sm:$0xff]
  %v324 = vld [vmem:[%s5 + $0x170] sm:$0xff]
  %v325 = vld [vmem:[%s5 + $0x178] sm:$0xff]
  %v326 = vld [vmem:[%s5 + $0x180] sm:$0xff]
  %v327 = vld [vmem:[%s5 + $0x188] sm:$0xff]
  %v328 = vld [vmem:[%s5 + $0x190] sm:$0xff]
  %v329 = vld [vmem:[%s5 + $0x198] sm:$0xff]
  %v330 = vld [vmem:[%s5 + $0x1a0] sm:$0xff]
  %v331 = vld [vmem:[%s5 + $0x1a8] sm:$0xff]
  %v332 = vld [vmem:[%s5 + $0x1b0] sm:$0xff]
  %v333 = vld [vmem:[%s5 + $0x1b8] sm:$0xff]
  %v334 = vld [vmem:[%s5 + $0x1c0] sm:$0xff]
  %v335 = vld [vmem:[%s5 + $0x1c8] sm:$0xff]
  %v336 = vld [vmem:[%s5 + $0x1d0] sm:$0xff]
  %v337 = vld [vmem:[%s5 + $0x1d8] sm:$0xff]
  %v338 = vld [vmem:[%s5 + $0x1e0] sm:$0xff]
  %v339 = vld [vmem:[%s5 + $0x1e8] sm:$0xff]
  %v340 = vld [vmem:[%s5 + $0x1f0] sm:$0xff]
  %v341 = vld [vmem:[%s5 + $0x1f8] sm:$0xff]
  %v342 = vld [vmem:[%s6] sm:$0xf]
  %v344 = vlaneseq
  %v345 = vshrl.u32 %v344, 7
  %v346 = vsub.s32 0, %v345
  %v347 = vrot.slane %v342, %v346
  %v348 = vlaneseq
  %v349 = vshrl.u32 %v348, 7
  %v350 = vsub.s32 1, %v349
  %v351 = vrot.slane %v342, %v350
  %v352 = vlaneseq
  %v353 = vshrl.u32 %v352, 7
  %v354 = vsub.s32 2, %v353
  %v355 = vrot.slane %v342, %v354
  %v356 = vlaneseq
  %v357 = vshrl.u32 %v356, 7
  %v358 = vsub.s32 3, %v357
  %v359 = vrot.slane %v342, %v358
  %v428 = vunpack.c.l.b16 %v278
  %v429 = vunpack.c.h.b16 %v278
  %v430 = vunpack.c.l.b16 %v279
  %v431 = vunpack.c.h.b16 %v279
  %v432 = vunpack.c.l.b16 %v280
  %v433 = vunpack.c.h.b16 %v280
  %v434 = vunpack.c.l.b16 %v281
  %v435 = vunpack.c.h.b16 %v281
  %v436 = vunpack.c.l.b16 %v282
  %v437 = vunpack.c.h.b16 %v282
  %v438 = vunpack.c.l.b16 %v283
  %v439 = vunpack.c.h.b16 %v283
  %v440 = vunpack.c.l.b16 %v284
  %v441 = vunpack.c.h.b16 %v284
  %v442 = vunpack.c.l.b16 %v285
  %v443 = vunpack.c.h.b16 %v285
  %v444 = vunpack.c.l.b16 %v286
  %v445 = vunpack.c.h.b16 %v286
  %v446 = vunpack.c.l.b16 %v287
  %v447 = vunpack.c.h.b16 %v287
  %v448 = vunpack.c.l.b16 %v288
  %v449 = vunpack.c.h.b16 %v288
  %v450 = vunpack.c.l.b16 %v289
  %v451 = vunpack.c.h.b16 %v289
  %v452 = vunpack.c.l.b16 %v290
  %v453 = vunpack.c.h.b16 %v290
  %v454 = vunpack.c.l.b16 %v291
  %v455 = vunpack.c.h.b16 %v291
  %v456 = vunpack.c.l.b16 %v292
  %v457 = vunpack.c.h.b16 %v292
  %v458 = vunpack.c.l.b16 %v293
  %v459 = vunpack.c.h.b16 %v293
  %v460 = vunpack.c.l.b16 %v294
  %v461 = vunpack.c.h.b16 %v294
  %v462 = vunpack.c.l.b16 %v295
  %v463 = vunpack.c.h.b16 %v295
  %v464 = vunpack.c.l.b16 %v296
  %v465 = vunpack.c.h.b16 %v296
  %v466 = vunpack.c.l.b16 %v297
  %v467 = vunpack.c.h.b16 %v297
  %v468 = vunpack.c.l.b16 %v298
  %v469 = vunpack.c.h.b16 %v298
  %v470 = vunpack.c.l.b16 %v299
  %v471 = vunpack.c.h.b16 %v299
  %v472 = vunpack.c.l.b16 %v300
  %v473 = vunpack.c.h.b16 %v300
  %v474 = vunpack.c.l.b16 %v301
  %v475 = vunpack.c.h.b16 %v301
  %v476 = vunpack.c.l.b16 %v302
  %v477 = vunpack.c.h.b16 %v302
  %v478 = vunpack.c.l.b16 %v303
  %v479 = vunpack.c.h.b16 %v303
  %v480 = vunpack.c.l.b16 %v304
  %v481 = vunpack.c.h.b16 %v304
  %v482 = vunpack.c.l.b16 %v305
  %v483 = vunpack.c.h.b16 %v305
  %v484 = vunpack.c.l.b16 %v306
  %v485 = vunpack.c.h.b16 %v306
  %v486 = vunpack.c.l.b16 %v307
  %v487 = vunpack.c.h.b16 %v307
  %v488 = vunpack.c.l.b16 %v308
  %v489 = vunpack.c.h.b16 %v308
  %v490 = vunpack.c.l.b16 %v309
  %v491 = vunpack.c.h.b16 %v309
  %v492 = vunpack.c.l.b16 %v310
  %v493 = vunpack.c.h.b16 %v310
  %v494 = vunpack.c.l.b16 %v311
  %v495 = vunpack.c.h.b16 %v311
  %v496 = vunpack.c.l.b16 %v312
  %v497 = vunpack.c.h.b16 %v312
  %v498 = vunpack.c.l.b16 %v313
  %v499 = vunpack.c.h.b16 %v313
  %v500 = vunpack.c.l.b16 %v314
  %v501 = vunpack.c.h.b16 %v314
  %v502 = vunpack.c.l.b16 %v315
  %v503 = vunpack.c.h.b16 %v315
  %v504 = vunpack.c.l.b16 %v316
  %v505 = vunpack.c.h.b16 %v316
  %v506 = vunpack.c.l.b16 %v317
  %v507 = vunpack.c.h.b16 %v317
  %v508 = vunpack.c.l.b16 %v318
  %v509 = vunpack.c.h.b16 %v318
  %v510 = vunpack.c.l.b16 %v319
  %v511 = vunpack.c.h.b16 %v319
  %v512 = vunpack.c.l.b16 %v320
  %v513 = vunpack.c.h.b16 %v320
  %v514 = vunpack.c.l.b16 %v321
  %v515 = vunpack.c.h.b16 %v321
  %v516 = vunpack.c.l.b16 %v322
  %v517 = vunpack.c.h.b16 %v322
  %v518 = vunpack.c.l.b16 %v323
  %v519 = vunpack.c.h.b16 %v323
  %v520 = vunpack.c.l.b16 %v324
  %v521 = vunpack.c.h.b16 %v324
  %v522 = vunpack.c.l.b16 %v325
  %v523 = vunpack.c.h.b16 %v325
  %v524 = vunpack.c.l.b16 %v326
  %v525 = vunpack.c.h.b16 %v326
  %v526 = vunpack.c.l.b16 %v327
  %v527 = vunpack.c.h.b16 %v327
  %v528 = vunpack.c.l.b16 %v328
  %v529 = vunpack.c.h.b16 %v328
  %v530 = vunpack.c.l.b16 %v329
  %v531 = vunpack.c.h.b16 %v329
  %v532 = vunpack.c.l.b16 %v330
  %v533 = vunpack.c.h.b16 %v330
  %v534 = vunpack.c.l.b16 %v331
  %v535 = vunpack.c.h.b16 %v331
  %v536 = vunpack.c.l.b16 %v332
  %v537 = vunpack.c.h.b16 %v332
  %v538 = vunpack.c.l.b16 %v333
  %v539 = vunpack.c.h.b16 %v333
  %v540 = vunpack.c.l.b16 %v334
  %v541 = vunpack.c.h.b16 %v334
  %v542 = vunpack.c.l.b16 %v335
  %v543 = vunpack.c.h.b16 %v335
  %v544 = vunpack.c.l.b16 %v336
  %v545 = vunpack.c.h.b16 %v336
  %v546 = vunpack.c.l.b16 %v337
  %v547 = vunpack.c.h.b16 %v337
  %v548 = vunpack.c.l.b16 %v338
  %v549 = vunpack.c.h.b16 %v338
  %v550 = vunpack.c.l.b16 %v339
  %v551 = vunpack.c.h.b16 %v339
  %v552 = vunpack.c.l.b16 %v340
  %v553 = vunpack.c.h.b16 %v340
  %v554 = vunpack.c.l.b16 %v341
  %v555 = vunpack.c.h.b16 %v341
  %v556 = vpack.c.b16 %v432, %v428
  %v557 = vpack.c.b16 %v433, %v429
  %v558 = vpack.c.b16 %v434, %v430
  %v559 = vpack.c.b16 %v435, %v431
  %v560 = vpack.c.b16 %v440, %v436
  %v561 = vpack.c.b16 %v441, %v437
  %v562 = vpack.c.b16 %v442, %v438
  %v563 = vpack.c.b16 %v443, %v439
  %v564 = vpack.c.b16 %v448, %v444
  %v565 = vpack.c.b16 %v449, %v445
  %v566 = vpack.c.b16 %v450, %v446
  %v567 = vpack.c.b16 %v451, %v447
  %v568 = vpack.c.b16 %v456, %v452
  %v569 = vpack.c.b16 %v457, %v453
  %v570 = vpack.c.b16 %v458, %v454
  %v571 = vpack.c.b16 %v459, %v455
  %v572 = vpack.c.b16 %v464, %v460
  %v573 = vpack.c.b16 %v465, %v461
  %v574 = vpack.c.b16 %v466, %v462
  %v575 = vpack.c.b16 %v467, %v463
  %v576 = vpack.c.b16 %v472, %v468
  %v577 = vpack.c.b16 %v473, %v469
  %v578 = vpack.c.b16 %v474, %v470
  %v579 = vpack.c.b16 %v475, %v471
  %v580 = vpack.c.b16 %v480, %v476
  %v581 = vpack.c.b16 %v481, %v477
  %v582 = vpack.c.b16 %v482, %v478
  %v583 = vpack.c.b16 %v483, %v479
  %v584 = vpack.c.b16 %v488, %v484
  %v585 = vpack.c.b16 %v489, %v485
  %v586 = vpack.c.b16 %v490, %v486
  %v587 = vpack.c.b16 %v491, %v487
  %v588 = vpack.c.b16 %v496, %v492
  %v589 = vpack.c.b16 %v497, %v493
  %v590 = vpack.c.b16 %v498, %v494
  %v591 = vpack.c.b16 %v499, %v495
  %v592 = vpack.c.b16 %v504, %v500
  %v593 = vpack.c.b16 %v505, %v501
  %v594 = vpack.c.b16 %v506, %v502
  %v595 = vpack.c.b16 %v507, %v503
  %v596 = vpack.c.b16 %v512, %v508
  %v597 = vpack.c.b16 %v513, %v509
  %v598 = vpack.c.b16 %v514, %v510
  %v599 = vpack.c.b16 %v515, %v511
  %v600 = vpack.c.b16 %v520, %v516
  %v601 = vpack.c.b16 %v521, %v517
  %v602 = vpack.c.b16 %v522, %v518
  %v603 = vpack.c.b16 %v523, %v519
  %v604 = vpack.c.b16 %v528, %v524
  %v605 = vpack.c.b16 %v529, %v525
  %v606 = vpack.c.b16 %v530, %v526
  %v607 = vpack.c.b16 %v531, %v527
  %v608 = vpack.c.b16 %v536, %v532
  %v609 = vpack.c.b16 %v537, %v533
  %v610 = vpack.c.b16 %v538, %v534
  %v611 = vpack.c.b16 %v539, %v535
  %v612 = vpack.c.b16 %v544, %v540
  %v613 = vpack.c.b16 %v545, %v541
  %v614 = vpack.c.b16 %v546, %v542
  %v615 = vpack.c.b16 %v547, %v543
  %v616 = vpack.c.b16 %v552, %v548
  %v617 = vpack.c.b16 %v553, %v549
  %v618 = vpack.c.b16 %v554, %v550
  %v619 = vpack.c.b16 %v555, %v551
  %684 = vmatprep.subr.bf16.mxu0 %v585
  %685 = vmatpush1.bf16.msra.mxu0 %v584
  %686 = vmatprep.subr.bf16.mxu0 %v581
  %687 = vmatpush1.bf16.msra.mxu0 %v580
  %688 = vmatprep.subr.bf16.mxu0 %v577
  %689 = vmatpush1.bf16.msra.mxu0 %v576
  %690 = vmatprep.subr.bf16.mxu0 %v573
  %691 = vmatpush1.bf16.msra.mxu0 %v572
  %692 = vmatprep.subr.bf16.mxu0 %v569
  %693 = vmatpush1.bf16.msra.mxu0 %v568
  %694 = vmatprep.subr.bf16.mxu0 %v565
  %695 = vmatpush1.bf16.msra.mxu0 %v564
  %696 = vmatprep.subr.bf16.mxu0 %v561
  %697 = vmatpush1.bf16.msra.mxu0 %v560
  %698 = vmatprep.subr.bf16.mxu0 %v557
  %699 = vmatpush1.bf16.msra.mxu0 %v556
  %700 = vmatprep.subr.bf16.mxu0 %v617
  %701 = vmatpush2.bf16.msra.mxu0 %v616
  %702 = vmatprep.subr.bf16.mxu0 %v613
  %703 = vmatpush2.bf16.msra.mxu0 %v612
  %704 = vmatprep.subr.bf16.mxu0 %v609
  %705 = vmatpush2.bf16.msra.mxu0 %v608
  %706 = vmatprep.subr.bf16.mxu0 %v605
  %707 = vmatpush2.bf16.msra.mxu0 %v604
  %708 = vmatprep.subr.bf16.mxu0 %v601
  %709 = vmatpush2.bf16.msra.mxu0 %v600
  %710 = vmatprep.subr.bf16.mxu0 %v597
  %711 = vmatpush2.bf16.msra.mxu0 %v596
  %712 = vmatprep.subr.bf16.mxu0 %v593
  %713 = vmatpush2.bf16.msra.mxu0 %v592
  %714 = vmatprep.subr.bf16.mxu0 %v589
  %715 = vmatpush2.bf16.msra.mxu0 %v588
  %716 = vmatprep.mubr.bf16.mxu0 %v277
  %717 = vmatmul.mubr.bf16.gmra.mxu0 %v276
  %v718 = vpop.f32.mrf.mxu0
  %v719 = vadd.f32 %v347, %v718
  %v720 = vpop.f32.mrf.mxu0
  %v721 = vadd.f32 %v351, %v720
  %v722 = vpop.f32.mrf.mxu0
  %v723 = vadd.f32 %v347, %v722
  %v724 = vpop.f32.mrf.mxu0
  %v725 = vadd.f32 %v351, %v724
  %726 = vdwg.mxu0
  %727 = vmatprep.subr.bf16.mxu0 %v587
  %728 = vmatpush1.bf16.msra.mxu0 %v586
  %729 = vmatprep.subr.bf16.mxu0 %v583
  %730 = vmatpush1.bf16.msra.mxu0 %v582
  %731 = vmatprep.subr.bf16.mxu0 %v579
  %732 = vmatpush1.bf16.msra.mxu0 %v578
  %733 = vmatprep.subr.bf16.mxu0 %v575
  %734 = vmatpush1.bf16.msra.mxu0 %v574
  %735 = vmatprep.subr.bf16.mxu0 %v571
  %736 = vmatpush1.bf16.msra.mxu0 %v570
  %737 = vmatprep.subr.bf16.mxu0 %v567
  %738 = vmatpush1.bf16.msra.mxu0 %v566
  %739 = vmatprep.subr.bf16.mxu0 %v563
  %740 = vmatpush1.bf16.msra.mxu0 %v562
  %741 = vmatprep.subr.bf16.mxu0 %v559
  %742 = vmatpush1.bf16.msra.mxu0 %v558
  %743 = vmatprep.subr.bf16.mxu0 %v619
  %744 = vmatpush2.bf16.msra.mxu0 %v618
  %745 = vmatprep.subr.bf16.mxu0 %v615
  %746 = vmatpush2.bf16.msra.mxu0 %v614
  %747 = vmatprep.subr.bf16.mxu0 %v611
  %748 = vmatpush2.bf16.msra.mxu0 %v610
  %749 = vmatprep.subr.bf16.mxu0 %v607
  %750 = vmatpush2.bf16.msra.mxu0 %v606
  %751 = vmatprep.subr.bf16.mxu0 %v603
  %752 = vmatpush2.bf16.msra.mxu0 %v602
  %753 = vmatprep.subr.bf16.mxu0 %v599
  %754 = vmatpush2.bf16.msra.mxu0 %v598
  %755 = vmatprep.subr.bf16.mxu0 %v595
  %756 = vmatpush2.bf16.msra.mxu0 %v594
  %757 = vmatprep.subr.bf16.mxu0 %v591
  %758 = vmatpush2.bf16.msra.mxu0 %v590
  %759 = vmatprep.mubr.bf16.mxu0 %v277
  %760 = vmatmul.mubr.bf16.gmra.mxu0 %v276
  %v761 = vpop.f32.mrf.mxu0
  %v762 = vadd.f32 %v355, %v761
  %v763 = vpop.f32.mrf.mxu0
  %v764 = vadd.f32 %v359, %v763
  %v765 = vpop.f32.mrf.mxu0
  %v766 = vadd.f32 %v355, %v765
  %v767 = vpop.f32.mrf.mxu0
  %v768 = vadd.f32 %v359, %v767
  %769 = vdwg.mxu0
  %v770 = vmax.f32 %v719, 0.0
  %v771 = vmax.f32 %v721, 0.0
  %v772 = vmax.f32 %v762, 0.0
  %v773 = vmax.f32 %v764, 0.0
  %v774 = vmax.f32 %v723, 0.0
  %v775 = vmax.f32 %v725, 0.0
  %v776 = vmax.f32 %v766, 0.0
  %v777 = vmax.f32 %v768, 0.0
  %v778 = vpack.c.bf16 %v774, %v770
  %v779 = vpack.c.bf16 %v775, %v771
  %v780 = vpack.c.bf16 %v776, %v772
  %v781 = vpack.c.bf16 %v777, %v773
  %v782 = vld [vmem:[%s7] sm:$0xff]
  %v783 = vld [vmem:[%s7 + $0x8] sm:$0xff]
  %v784 = vld [vmem:[%s7 + $0x10] sm:$0xff]
  %v785 = vld [vmem:[%s7 + $0x18] sm:$0xff]
  %v786 = vld [vmem:[%s7 + $0x20] sm:$0xff]
  %v787 = vld [vmem:[%s7 + $0x28] sm:$0xff]
  %v788 = vld [vmem:[%s7 + $0x30] sm:$0xff]
  %v789 = vld [vmem:[%s7 + $0x38] sm:$0xff]
  %v790 = vld [vmem:[%s7 + $0x40] sm:$0xff]
  %v791 = vld [vmem:[%s7 + $0x48] sm:$0xff]
  %v792 = vld [vmem:[%s7 + $0x50] sm:$0xff]
  %v793 = vld [vmem:[%s7 + $0x58] sm:$0xff]
  %v794 = vld [vmem:[%s7 + $0x60] sm:$0xff]
  %v795 = vld [vmem:[%s7 + $0x68] sm:$0xff]
  %v796 = vld [vmem:[%s7 + $0x70] sm:$0xff]
  %v797 = vld [vmem:[%s7 + $0x78] sm:$0xff]
  %v798 = vld [vmem:[%s7 + $0x80] sm:$0xff]
  %v799 = vld [vmem:[%s7 + $0x88] sm:$0xff]
  %v800 = vld [vmem:[%s7 + $0x90] sm:$0xff]
  %v801 = vld [vmem:[%s7 + $0x98] sm:$0xff]
  %v802 = vld [vmem:[%s7 + $0xa0] sm:$0xff]
  %v803 = vld [vmem:[%s7 + $0xa8] sm:$0xff]
  %v804 = vld [vmem:[%s7 + $0xb0] sm:$0xff]
  %v805 = vld [vmem:[%s7 + $0xb8] sm:$0xff]
  %v806 = vld [vmem:[%s7 + $0xc0] sm:$0xff]
  %v807 = vld [vmem:[%s7 + $0xc8] sm:$0xff]
  %v808 = vld [vmem:[%s7 + $0xd0] sm:$0xff]
  %v809 = vld [vmem:[%s7 + $0xd8] sm:$0xff]
  %v810 = vld [vmem:[%s7 + $0xe0] sm:$0xff]
  %v811 = vld [vmem:[%s7 + $0xe8] sm:$0xff]
  %v812 = vld [vmem:[%s7 + $0xf0] sm:$0xff]
  %v813 = vld [vmem:[%s7 + $0xf8] sm:$0xff]
  %v814 = vld [vmem:[%s7 + $0x100] sm:$0xff]
  %v815 = vld [vmem:[%s7 + $0x108] sm:$0xff]
  %v816 = vld [vmem:[%s7 + $0x110] sm:$0xff]
  %v817 = vld [vmem:[%s7 + $0x118] sm:$0xff]
  %v818 = vld [vmem:[%s7 + $0x120] sm:$0xff]
  %v819 = vld [vmem:[%s7 + $0x128] sm:$0xff]
  %v820 = vld [vmem:[%s7 + $0x130] sm:$0xff]
  %v821 = vld [vmem:[%s7 + $0x138] sm:$0xff]
  %v822 = vld [vmem:[%s7 + $0x140] sm:$0xff]
  %v823 = vld [vmem:[%s7 + $0x148] sm:$0xff]
  %v824 = vld [vmem:[%s7 + $0x150] sm:$0xff]
  %v825 = vld [vmem:[%s7 + $0x158] sm:$0xff]
  %v826 = vld [vmem:[%s7 + $0x160] sm:$0xff]
  %v827 = vld [vmem:[%s7 + $0x168] sm:$0xff]
  %v828 = vld [vmem:[%s7 + $0x170] sm:$0xff]
  %v829 = vld [vmem:[%s7 + $0x178] sm:$0xff]
  %v830 = vld [vmem:[%s7 + $0x180] sm:$0xff]
  %v831 = vld [vmem:[%s7 + $0x188] sm:$0xff]
  %v832 = vld [vmem:[%s7 + $0x190] sm:$0xff]
  %v833 = vld [vmem:[%s7 + $0x198] sm:$0xff]
  %v834 = vld [vmem:[%s7 + $0x1a0] sm:$0xff]
  %v835 = vld [vmem:[%s7 + $0x1a8] sm:$0xff]
  %v836 = vld [vmem:[%s7 + $0x1b0] sm:$0xff]
  %v837 = vld [vmem:[%s7 + $0x1b8] sm:$0xff]
  %v838 = vld [vmem:[%s7 + $0x1c0] sm:$0xff]
  %v839 = vld [vmem:[%s7 + $0x1c8] sm:$0xff]
  %v840 = vld [vmem:[%s7 + $0x1d0] sm:$0xff]
  %v841 = vld [vmem:[%s7 + $0x1d8] sm:$0xff]
  %v842 = vld [vmem:[%s7 + $0x1e0] sm:$0xff]
  %v843 = vld [vmem:[%s7 + $0x1e8] sm:$0xff]
  %v844 = vld [vmem:[%s7 + $0x1f0] sm:$0xff]
  %v845 = vld [vmem:[%s7 + $0x1f8] sm:$0xff]
  %v846 = vld [vmem:[%s8] sm:$0x3]
  %v848 = vlaneseq
  %v849 = vshrl.u32 %v848, 7
  %v850 = vsub.s32 0, %v849
  %v851 = vrot.slane %v846, %v850
  %v852 = vlaneseq
  %v853 = vshrl.u32 %v852, 7
  %v854 = vsub.s32 1, %v853
  %v855 = vrot.slane %v846, %v854
  %v922 = vunpack.c.l.b16 %v782
  %v923 = vunpack.c.h.b16 %v782
  %v924 = vunpack.c.l.b16 %v783
  %v925 = vunpack.c.h.b16 %v783
  %v926 = vunpack.c.l.b16 %v784
  %v927 = vunpack.c.h.b16 %v784
  %v928 = vunpack.c.l.b16 %v785
  %v929 = vunpack.c.h.b16 %v785
  %v930 = vunpack.c.l.b16 %v786
  %v931 = vunpack.c.h.b16 %v786
  %v932 = vunpack.c.l.b16 %v787
  %v933 = vunpack.c.h.b16 %v787
  %v934 = vunpack.c.l.b16 %v788
  %v935 = vunpack.c.h.b16 %v788
  %v936 = vunpack.c.l.b16 %v789
  %v937 = vunpack.c.h.b16 %v789
  %v938 = vunpack.c.l.b16 %v790
  %v939 = vunpack.c.h.b16 %v790
  %v940 = vunpack.c.l.b16 %v791
  %v941 = vunpack.c.h.b16 %v791
  %v942 = vunpack.c.l.b16 %v792
  %v943 = vunpack.c.h.b16 %v792
  %v944 = vunpack.c.l.b16 %v793
  %v945 = vunpack.c.h.b16 %v793
  %v946 = vunpack.c.l.b16 %v794
  %v947 = vunpack.c.h.b16 %v794
  %v948 = vunpack.c.l.b16 %v795
  %v949 = vunpack.c.h.b16 %v795
  %v950 = vunpack.c.l.b16 %v796
  %v951 = vunpack.c.h.b16 %v796
  %v952 = vunpack.c.l.b16 %v797
  %v953 = vunpack.c.h.b16 %v797
  %v954 = vunpack.c.l.b16 %v798
  %v955 = vunpack.c.h.b16 %v798
  %v956 = vunpack.c.l.b16 %v799
  %v957 = vunpack.c.h.b16 %v799
  %v958 = vunpack.c.l.b16 %v800
  %v959 = vunpack.c.h.b16 %v800
  %v960 = vunpack.c.l.b16 %v801
  %v961 = vunpack.c.h.b16 %v801
  %v962 = vunpack.c.l.b16 %v802
  %v963 = vunpack.c.h.b16 %v802
  %v964 = vunpack.c.l.b16 %v803
  %v965 = vunpack.c.h.b16 %v803
  %v966 = vunpack.c.l.b16 %v804
  %v967 = vunpack.c.h.b16 %v804
  %v968 = vunpack.c.l.b16 %v805
  %v969 = vunpack.c.h.b16 %v805
  %v970 = vunpack.c.l.b16 %v806
  %v971 = vunpack.c.h.b16 %v806
  %v972 = vunpack.c.l.b16 %v807
  %v973 = vunpack.c.h.b16 %v807
  %v974 = vunpack.c.l.b16 %v808
  %v975 = vunpack.c.h.b16 %v808
  %v976 = vunpack.c.l.b16 %v809
  %v977 = vunpack.c.h.b16 %v809
  %v978 = vunpack.c.l.b16 %v810
  %v979 = vunpack.c.h.b16 %v810
  %v980 = vunpack.c.l.b16 %v811
  %v981 = vunpack.c.h.b16 %v811
  %v982 = vunpack.c.l.b16 %v812
  %v983 = vunpack.c.h.b16 %v812
  %v984 = vunpack.c.l.b16 %v813
  %v985 = vunpack.c.h.b16 %v813
  %v986 = vunpack.c.l.b16 %v814
  %v987 = vunpack.c.h.b16 %v814
  %v988 = vunpack.c.l.b16 %v815
  %v989 = vunpack.c.h.b16 %v815
  %v990 = vunpack.c.l.b16 %v816
  %v991 = vunpack.c.h.b16 %v816
  %v992 = vunpack.c.l.b16 %v817
  %v993 = vunpack.c.h.b16 %v817
  %v994 = vunpack.c.l.b16 %v818
  %v995 = vunpack.c.h.b16 %v818
  %v996 = vunpack.c.l.b16 %v819
  %v997 = vunpack.c.h.b16 %v819
  %v998 = vunpack.c.l.b16 %v820
  %v999 = vunpack.c.h.b16 %v820
  %v1000 = vunpack.c.l.b16 %v821
  %v1001 = vunpack.c.h.b16 %v821
  %v1002 = vunpack.c.l.b16 %v822
  %v1003 = vunpack.c.h.b16 %v822
  %v1004 = vunpack.c.l.b16 %v823
  %v1005 = vunpack.c.h.b16 %v823
  %v1006 = vunpack.c.l.b16 %v824
  %v1007 = vunpack.c.h.b16 %v824
  %v1008 = vunpack.c.l.b16 %v825
  %v1009 = vunpack.c.h.b16 %v825
  %v1010 = vunpack.c.l.b16 %v826
  %v1011 = vunpack.c.h.b16 %v826
  %v1012 = vunpack.c.l.b16 %v827
  %v1013 = vunpack.c.h.b16 %v827
  %v1014 = vunpack.c.l.b16 %v828
  %v1015 = vunpack.c.h.b16 %v828
  %v1016 = vunpack.c.l.b16 %v829
  %v1017 = vunpack.c.h.b16 %v829
  %v1018 = vunpack.c.l.b16 %v830
  %v1019 = vunpack.c.h.b16 %v830
  %v1020 = vunpack.c.l.b16 %v831
  %v1021 = vunpack.c.h.b16 %v831
  %v1022 = vunpack.c.l.b16 %v832
  %v1023 = vunpack.c.h.b16 %v832
  %v1024 = vunpack.c.l.b16 %v833
  %v1025 = vunpack.c.h.b16 %v833
  %v1026 = vunpack.c.l.b16 %v834
  %v1027 = vunpack.c.h.b16 %v834
  %v1028 = vunpack.c.l.b16 %v835
  %v1029 = vunpack.c.h.b16 %v835
  %v1030 = vunpack.c.l.b16 %v836
  %v1031 = vunpack.c.h.b16 %v836
  %v1032 = vunpack.c.l.b16 %v837
  %v1033 = vunpack.c.h.b16 %v837
  %v1034 = vunpack.c.l.b16 %v838
  %v1035 = vunpack.c.h.b16 %v838
  %v1036 = vunpack.c.l.b16 %v839
  %v1037 = vunpack.c.h.b16 %v839
  %v1038 = vunpack.c.l.b16 %v840
  %v1039 = vunpack.c.h.b16 %v840
  %v1040 = vunpack.c.l.b16 %v841
  %v1041 = vunpack.c.h.b16 %v841
  %v1042 = vunpack.c.l.b16 %v842
  %v1043 = vunpack.c.h.b16 %v842
  %v1044 = vunpack.c.l.b16 %v843
  %v1045 = vunpack.c.h.b16 %v843
  %v1046 = vunpack.c.l.b16 %v844
  %v1047 = vunpack.c.h.b16 %v844
  %v1048 = vunpack.c.l.b16 %v845
  %v1049 = vunpack.c.h.b16 %v845
  %v1050 = vpack.c.b16 %v924, %v922
  %v1051 = vpack.c.b16 %v925, %v923
  %v1052 = vpack.c.b16 %v928, %v926
  %v1053 = vpack.c.b16 %v929, %v927
  %v1054 = vpack.c.b16 %v932, %v930
  %v1055 = vpack.c.b16 %v933, %v931
  %v1056 = vpack.c.b16 %v936, %v934
  %v1057 = vpack.c.b16 %v937, %v935
  %v1058 = vpack.c.b16 %v940, %v938
  %v1059 = vpack.c.b16 %v941, %v939
  %v1060 = vpack.c.b16 %v944, %v942
  %v1061 = vpack.c.b16 %v945, %v943
  %v1062 = vpack.c.b16 %v948, %v946
  %v1063 = vpack.c.b16 %v949, %v947
  %v1064 = vpack.c.b16 %v952, %v950
  %v1065 = vpack.c.b16 %v953, %v951
  %v1066 = vpack.c.b16 %v956, %v954
  %v1067 = vpack.c.b16 %v957, %v955
  %v1068 = vpack.c.b16 %v960, %v958
  %v1069 = vpack.c.b16 %v961, %v959
  %v1070 = vpack.c.b16 %v964, %v962
  %v1071 = vpack.c.b16 %v965, %v963
  %v1072 = vpack.c.b16 %v968, %v966
  %v1073 = vpack.c.b16 %v969, %v967
  %v1074 = vpack.c.b16 %v972, %v970
  %v1075 = vpack.c.b16 %v973, %v971
  %v1076 = vpack.c.b16 %v976, %v974
  %v1077 = vpack.c.b16 %v977, %v975
  %v1078 = vpack.c.b16 %v980, %v978
  %v1079 = vpack.c.b16 %v981, %v979
  %v1080 = vpack.c.b16 %v984, %v982
  %v1081 = vpack.c.b16 %v985, %v983
  %v1082 = vpack.c.b16 %v988, %v986
  %v1083 = vpack.c.b16 %v989, %v987
  %v1084 = vpack.c.b16 %v992, %v990
  %v1085 = vpack.c.b16 %v993, %v991
  %v1086 = vpack.c.b16 %v996, %v994
  %v1087 = vpack.c.b16 %v997, %v995
  %v1088 = vpack.c.b16 %v1000, %v998
  %v1089 = vpack.c.b16 %v1001, %v999
  %v1090 = vpack.c.b16 %v1004, %v1002
  %v1091 = vpack.c.b16 %v1005, %v1003
  %v1092 = vpack.c.b16 %v1008, %v1006
  %v1093 = vpack.c.b16 %v1009, %v1007
  %v1094 = vpack.c.b16 %v1012, %v1010
  %v1095 = vpack.c.b16 %v1013, %v1011
  %v1096 = vpack.c.b16 %v1016, %v1014
  %v1097 = vpack.c.b16 %v1017, %v1015
  %v1098 = vpack.c.b16 %v1020, %v1018
  %v1099 = vpack.c.b16 %v1021, %v1019
  %v1100 = vpack.c.b16 %v1024, %v1022
  %v1101 = vpack.c.b16 %v1025, %v1023
  %v1102 = vpack.c.b16 %v1028, %v1026
  %v1103 = vpack.c.b16 %v1029, %v1027
  %v1104 = vpack.c.b16 %v1032, %v1030
  %v1105 = vpack.c.b16 %v1033, %v1031
  %v1106 = vpack.c.b16 %v1036, %v1034
  %v1107 = vpack.c.b16 %v1037, %v1035
  %v1108 = vpack.c.b16 %v1040, %v1038
  %v1109 = vpack.c.b16 %v1041, %v1039
  %v1110 = vpack.c.b16 %v1044, %v1042
  %v1111 = vpack.c.b16 %v1045, %v1043
  %v1112 = vpack.c.b16 %v1048, %v1046
  %v1113 = vpack.c.b16 %v1049, %v1047
  %1178 = vmatprep.subr.bf16.mxu0 %v1065
  %1179 = vmatpush1.bf16.msra.mxu0 %v1064
  %1180 = vmatprep.subr.bf16.mxu0 %v1063
  %1181 = vmatpush1.bf16.msra.mxu0 %v1062
  %1182 = vmatprep.subr.bf16.mxu0 %v1061
  %1183 = vmatpush1.bf16.msra.mxu0 %v1060
  %1184 = vmatprep.subr.bf16.mxu0 %v1059
  %1185 = vmatpush1.bf16.msra.mxu0 %v1058
  %1186 = vmatprep.subr.bf16.mxu0 %v1057
  %1187 = vmatpush1.bf16.msra.mxu0 %v1056
  %1188 = vmatprep.subr.bf16.mxu0 %v1055
  %1189 = vmatpush1.bf16.msra.mxu0 %v1054
  %1190 = vmatprep.subr.bf16.mxu0 %v1053
  %1191 = vmatpush1.bf16.msra.mxu0 %v1052
  %1192 = vmatprep.subr.bf16.mxu0 %v1051
  %1193 = vmatpush1.bf16.msra.mxu0 %v1050
  %1194 = vmatprep.subr.bf16.mxu0 %v1081
  %1195 = vmatpush2.bf16.msra.mxu0 %v1080
  %1196 = vmatprep.subr.bf16.mxu0 %v1079
  %1197 = vmatpush2.bf16.msra.mxu0 %v1078
  %1198 = vmatprep.subr.bf16.mxu0 %v1077
  %1199 = vmatpush2.bf16.msra.mxu0 %v1076
  %1200 = vmatprep.subr.bf16.mxu0 %v1075
  %1201 = vmatpush2.bf16.msra.mxu0 %v1074
  %1202 = vmatprep.subr.bf16.mxu0 %v1073
  %1203 = vmatpush2.bf16.msra.mxu0 %v1072
  %1204 = vmatprep.subr.bf16.mxu0 %v1071
  %1205 = vmatpush2.bf16.msra.mxu0 %v1070
  %1206 = vmatprep.subr.bf16.mxu0 %v1069
  %1207 = vmatpush2.bf16.msra.mxu0 %v1068
  %1208 = vmatprep.subr.bf16.mxu0 %v1067
  %1209 = vmatpush2.bf16.msra.mxu0 %v1066
  %1210 = vmatprep.mubr.bf16.mxu0 %v779
  %1211 = vmatmul.mubr.bf16.gmra.mxu0 %v778
  %v1212 = vpop.f32.mrf.mxu0
  %v1213 = vadd.f32 %v851, %v1212
  %v1214 = vpop.f32.mrf.mxu0
  %v1215 = vadd.f32 %v855, %v1214
  %v1216 = vpop.f32.mrf.mxu0
  %v1217 = vadd.f32 %v851, %v1216
  %v1218 = vpop.f32.mrf.mxu0
  %v1219 = vadd.f32 %v855, %v1218
  %1220 = vdwg.mxu0
  %1221 = vmatprep.subr.bf16.mxu0 %v1097
  %1222 = vmatpush1.bf16.msra.mxu0 %v1096
  %1223 = vmatprep.subr.bf16.mxu0 %v1095
  %1224 = vmatpush1.bf16.msra.mxu0 %v1094
  %1225 = vmatprep.subr.bf16.mxu0 %v1093
  %1226 = vmatpush1.bf16.msra.mxu0 %v1092
  %1227 = vmatprep.subr.bf16.mxu0 %v1091
  %1228 = vmatpush1.bf16.msra.mxu0 %v1090
  %1229 = vmatprep.subr.bf16.mxu0 %v1089
  %1230 = vmatpush1.bf16.msra.mxu0 %v1088
  %1231 = vmatprep.subr.bf16.mxu0 %v1087
  %1232 = vmatpush1.bf16.msra.mxu0 %v1086
  %1233 = vmatprep.subr.bf16.mxu0 %v1085
  %1234 = vmatpush1.bf16.msra.mxu0 %v1084
  %1235 = vmatprep.subr.bf16.mxu0 %v1083
  %1236 = vmatpush1.bf16.msra.mxu0 %v1082
  %1237 = vmatprep.subr.bf16.mxu0 %v1113
  %1238 = vmatpush2.bf16.msra.mxu0 %v1112
  %1239 = vmatprep.subr.bf16.mxu0 %v1111
  %1240 = vmatpush2.bf16.msra.mxu0 %v1110
  %1241 = vmatprep.subr.bf16.mxu0 %v1109
  %1242 = vmatpush2.bf16.msra.mxu0 %v1108
  %1243 = vmatprep.subr.bf16.mxu0 %v1107
  %1244 = vmatpush2.bf16.msra.mxu0 %v1106
  %1245 = vmatprep.subr.bf16.mxu0 %v1105
  %1246 = vmatpush2.bf16.msra.mxu0 %v1104
  %1247 = vmatprep.subr.bf16.mxu0 %v1103
  %1248 = vmatpush2.bf16.msra.mxu0 %v1102
  %1249 = vmatprep.subr.bf16.mxu0 %v1101
  %1250 = vmatpush2.bf16.msra.mxu0 %v1100
  %1251 = vmatprep.subr.bf16.mxu0 %v1099
  %1252 = vmatpush2.bf16.msra.mxu0 %v1098
  %1253 = vmatprep.mubr.bf16.mxu0 %v781
  %1254 = vmatmul.mubr.bf16.gmra.mxu0 %v780
  %v1255 = vpop.f32.mrf.mxu0
  %v1256 = vadd.f32 %v1213, %v1255
  %v1257 = vpop.f32.mrf.mxu0
  %v1258 = vadd.f32 %v1215, %v1257
  %v1259 = vpop.f32.mrf.mxu0
  %v1260 = vadd.f32 %v1217, %v1259
  %v1261 = vpop.f32.mrf.mxu0
  %v1262 = vadd.f32 %v1219, %v1261
  %1263 = vdwg.mxu0
  %v1264 = vmax.f32 %v1256, 0.0
  %v1265 = vmax.f32 %v1258, 0.0
  %v1266 = vmax.f32 %v1260, 0.0
  %v1267 = vmax.f32 %v1262, 0.0
  %v1268 = vpack.c.bf16 %v1266, %v1264
  %v1269 = vpack.c.bf16 %v1267, %v1265
  %v1270 = vld [vmem:[%s9] sm:$0xf]
  %v1271 = vld [vmem:[%s9 + $0x4] sm:$0xf]
  %v1272 = vld [vmem:[%s9 + $0x8] sm:$0xf]
  %v1273 = vld [vmem:[%s9 + $0xc] sm:$0xf]
  %v1274 = vld [vmem:[%s9 + $0x10] sm:$0xf]
  %v1275 = vld [vmem:[%s9 + $0x14] sm:$0xf]
  %v1276 = vld [vmem:[%s9 + $0x18] sm:$0xf]
  %v1277 = vld [vmem:[%s9 + $0x1c] sm:$0xf]
  %v1278 = vld [vmem:[%s9 + $0x20] sm:$0xf]
  %v1279 = vld [vmem:[%s9 + $0x24] sm:$0xf]
  %v1280 = vld [vmem:[%s9 + $0x28] sm:$0xf]
  %v1281 = vld [vmem:[%s9 + $0x2c] sm:$0xf]
  %v1282 = vld [vmem:[%s9 + $0x30] sm:$0xf]
  %v1283 = vld [vmem:[%s9 + $0x34] sm:$0xf]
  %v1284 = vld [vmem:[%s9 + $0x38] sm:$0xf]
  %v1285 = vld [vmem:[%s9 + $0x3c] sm:$0xf]
  %v1286 = vld [vmem:[%s9 + $0x40] sm:$0xf]
  %v1287 = vld [vmem:[%s9 + $0x44] sm:$0xf]
  %v1288 = vld [vmem:[%s9 + $0x48] sm:$0xf]
  %v1289 = vld [vmem:[%s9 + $0x4c] sm:$0xf]
  %v1290 = vld [vmem:[%s9 + $0x50] sm:$0xf]
  %v1291 = vld [vmem:[%s9 + $0x54] sm:$0xf]
  %v1292 = vld [vmem:[%s9 + $0x58] sm:$0xf]
  %v1293 = vld [vmem:[%s9 + $0x5c] sm:$0xf]
  %v1294 = vld [vmem:[%s9 + $0x60] sm:$0xf]
  %v1295 = vld [vmem:[%s9 + $0x64] sm:$0xf]
  %v1296 = vld [vmem:[%s9 + $0x68] sm:$0xf]
  %v1297 = vld [vmem:[%s9 + $0x6c] sm:$0xf]
  %v1298 = vld [vmem:[%s9 + $0x70] sm:$0xf]
  %v1299 = vld [vmem:[%s9 + $0x74] sm:$0xf]
  %v1300 = vld [vmem:[%s9 + $0x78] sm:$0xf]
  %v1301 = vld [vmem:[%s9 + $0x7c] sm:$0xf]
  %v1302 = vld [vmem:[%s10] sm:$0x1]
  %v1304 = vlaneseq
  %v1305 = vshrl.u32 %v1304, 7
  %v1306 = vsub.s32 0, %v1305
  %v1307 = vrot.slane %v1302, %v1306
  %v1341 = vunpack.c.l.b16 %v1270
  %v1342 = vunpack.c.l.b16 %v1271
  %v1343 = vunpack.c.l.b16 %v1272
  %v1344 = vunpack.c.l.b16 %v1273
  %v1345 = vunpack.c.l.b16 %v1274
  %v1346 = vunpack.c.l.b16 %v1275
  %v1347 = vunpack.c.l.b16 %v1276
  %v1348 = vunpack.c.l.b16 %v1277
  %v1349 = vunpack.c.l.b16 %v1278
  %v1350 = vunpack.c.l.b16 %v1279
  %v1351 = vunpack.c.l.b16 %v1280
  %v1352 = vunpack.c.l.b16 %v1281
  %v1353 = vunpack.c.l.b16 %v1282
  %v1354 = vunpack.c.l.b16 %v1283
  %v1355 = vunpack.c.l.b16 %v1284
  %v1356 = vunpack.c.l.b16 %v1285
  %v1357 = vunpack.c.l.b16 %v1286
  %v1358 = vunpack.c.l.b16 %v1287
  %v1359 = vunpack.c.l.b16 %v1288
  %v1360 = vunpack.c.l.b16 %v1289
  %v1361 = vunpack.c.l.b16 %v1290
  %v1362 = vunpack.c.l.b16 %v1291
  %v1363 = vunpack.c.l.b16 %v1292
  %v1364 = vunpack.c.l.b16 %v1293
  %v1365 = vunpack.c.l.b16 %v1294
  %v1366 = vunpack.c.l.b16 %v1295
  %v1367 = vunpack.c.l.b16 %v1296
  %v1368 = vunpack.c.l.b16 %v1297
  %v1369 = vunpack.c.l.b16 %v1298
  %v1370 = vunpack.c.l.b16 %v1299
  %v1371 = vunpack.c.l.b16 %v1300
  %v1372 = vunpack.c.l.b16 %v1301
  %v1373 = vpack.c.b16 %v1342, %v1341
  %v1374 = vpack.c.b16 %v1344, %v1343
  %v1375 = vpack.c.b16 %v1346, %v1345
  %v1376 = vpack.c.b16 %v1348, %v1347
  %v1377 = vpack.c.b16 %v1350, %v1349
  %v1378 = vpack.c.b16 %v1352, %v1351
  %v1379 = vpack.c.b16 %v1354, %v1353
  %v1380 = vpack.c.b16 %v1356, %v1355
  %v1381 = vpack.c.b16 %v1358, %v1357
  %v1382 = vpack.c.b16 %v1360, %v1359
  %v1383 = vpack.c.b16 %v1362, %v1361
  %v1384 = vpack.c.b16 %v1364, %v1363
  %v1385 = vpack.c.b16 %v1366, %v1365
  %v1386 = vpack.c.b16 %v1368, %v1367
  %v1387 = vpack.c.b16 %v1370, %v1369
  %v1388 = vpack.c.b16 %v1372, %v1371
  %1405 = vmatprep.subr.bf16.mxu0 0
  %1406 = vmatpush1.bf16.msra.mxu0 %v1380
  %1407 = vmatprep.subr.bf16.mxu0 0
  %1408 = vmatpush1.bf16.msra.mxu0 %v1379
  %1409 = vmatprep.subr.bf16.mxu0 0
  %1410 = vmatpush1.bf16.msra.mxu0 %v1378
  %1411 = vmatprep.subr.bf16.mxu0 0
  %1412 = vmatpush1.bf16.msra.mxu0 %v1377
  %1413 = vmatprep.subr.bf16.mxu0 0
  %1414 = vmatpush1.bf16.msra.mxu0 %v1376
  %1415 = vmatprep.subr.bf16.mxu0 0
  %1416 = vmatpush1.bf16.msra.mxu0 %v1375
  %1417 = vmatprep.subr.bf16.mxu0 0
  %1418 = vmatpush1.bf16.msra.mxu0 %v1374
  %1419 = vmatprep.subr.bf16.mxu0 0
  %1420 = vmatpush1.bf16.msra.mxu0 %v1373
  %1421 = vmatprep.subr.bf16.mxu0 0
  %1422 = vmatpush2.bf16.msra.mxu0 %v1388
  %1423 = vmatprep.subr.bf16.mxu0 0
  %1424 = vmatpush2.bf16.msra.mxu0 %v1387
  %1425 = vmatprep.subr.bf16.mxu0 0
  %1426 = vmatpush2.bf16.msra.mxu0 %v1386
  %1427 = vmatprep.subr.bf16.mxu0 0
  %1428 = vmatpush2.bf16.msra.mxu0 %v1385
  %1429 = vmatprep.subr.bf16.mxu0 0
  %1430 = vmatpush2.bf16.msra.mxu0 %v1384
  %1431 = vmatprep.subr.bf16.mxu0 0
  %1432 = vmatpush2.bf16.msra.mxu0 %v1383
  %1433 = vmatprep.subr.bf16.mxu0 0
  %1434 = vmatpush2.bf16.msra.mxu0 %v1382
  %1435 = vmatprep.subr.bf16.mxu0 0
  %1436 = vmatpush2.bf16.msra.mxu0 %v1381
  %1437 = vmatprep.mubr.bf16.mxu0 %v1269
  %1438 = vmatmul.mubr.bf16.gmra.mxu0 %v1268
  %v1439 = vpop.f32.mrf.mxu0
  %v1440 = vadd.f32 %v1307, %v1439
  %v1441 = vpop.f32.mrf.mxu0
  %v1442 = vpop.f32.mrf.mxu0
  %v1443 = vadd.f32 %v1307, %v1442
  %v1444 = vpop.f32.mrf.mxu0
  %1445 = vdwg.mxu0
  %v1446 = vmax.f32 %v1440, 0.0
  %v1447 = vmax.f32 %v1443, 0.0
  %v1448 = vpack.c.bf16 %v1447, %v1446
  %v1449 = vld [vmem:[%s11] sm:$0x1]
  %v1450 = vld [vmem:[#allocation2] sm:$0x1]
  %1452 = vset.pattern.permute.xlu0 0
  %1453 = vperm.xlu0 %1452, %v1450
  %v1454 = vpop.permute.xlu0 %1453
  %v1456 = vlaneseq
  %v1457 = vshrl.u32 %v1456, 7
  %v1458 = vsub.s32 0, %v1457
  %v1459 = vrot.slane %v1454, %v1458
  %1460 = vmatprep.subr.bf16.mxu0 0
  %1461 = vmatpush1.bf16.xpose.msra.mxu0 0
  %1462 = vmatprep.subr.bf16.mxu0 0
  %1463 = vmatpush1.bf16.xpose.msra.mxu0 0
  %1464 = vmatprep.subr.bf16.mxu0 0
  %1465 = vmatpush1.bf16.xpose.msra.mxu0 0
  %1466 = vmatprep.subr.bf16.mxu0 0
  %1467 = vmatpush1.bf16.xpose.msra.mxu0 0
  %1468 = vmatprep.subr.bf16.mxu0 0
  %1469 = vmatpush1.bf16.xpose.msra.mxu0 0
  %1470 = vmatprep.subr.bf16.mxu0 0
  %1471 = vmatpush1.bf16.xpose.msra.mxu0 0
  %1472 = vmatprep.subr.bf16.mxu0 0
  %1473 = vmatpush1.bf16.xpose.msra.mxu0 0
  %1474 = vmatprep.subr.bf16.mxu0 0
  %1475 = vmatpush1.bf16.xpose.msra.mxu0 %v1448
  %1476 = vmatprep.subr.bf16.mxu0 0
  %1477 = vmatpush2.bf16.xpose.msra.mxu0 0
  %1478 = vmatprep.subr.bf16.mxu0 0
  %1479 = vmatpush2.bf16.xpose.msra.mxu0 0
  %1480 = vmatprep.subr.bf16.mxu0 0
  %1481 = vmatpush2.bf16.xpose.msra.mxu0 0
  %1482 = vmatprep.subr.bf16.mxu0 0
  %1483 = vmatpush2.bf16.xpose.msra.mxu0 0
  %1484 = vmatprep.subr.bf16.mxu0 0
  %1485 = vmatpush2.bf16.xpose.msra.mxu0 0
  %1486 = vmatprep.subr.bf16.mxu0 0
  %1487 = vmatpush2.bf16.xpose.msra.mxu0 0
  %1488 = vmatprep.subr.bf16.mxu0 0
  %1489 = vmatpush2.bf16.xpose.msra.mxu0 0
  %1490 = vmatprep.subr.bf16.mxu0 0
  %1491 = vmatpush2.bf16.xpose.msra.mxu0 0
  %1492 = vmatprep.mubr.bf16.mxu0 0
  %1493 = vmatmul.mubr.bf16.gmra.mxu0 %v1449
  %v1494 = vpop.f32.mrf.mxu0
  %v1495 = vadd.f32 %v1459, %v1494
  %v1496 = vpop.f32.mrf.mxu0
  %v1497 = vpop.f32.mrf.mxu0
  %v1498 = vpop.f32.mrf.mxu0
  %1499 = vdwg.mxu0
  %vm1500 = vcmask 122880
  %1501 = vst.msk [vmem:[%s13] sm:$0x1] %vm1500, %v1495
  // Predicated region
  $region54: #{mlp_forward.1} parent=0 // pred_check
    _
  $region55: #{mlp_forward.1} parent=0 // pred_check_branch
    %1503 = sbr.rel (0) target = $region57
  $region56: #{mlp_forward.1} parent=0 // pred_region
    _
  $region57: #{mlp_forward.1} parent=0 // pred_fallthru
    _
  // Predicated region
  $region58: #{mlp_forward.1} parent=0 // pred_check
    _
  $region59: #{mlp_forward.1} parent=0 // pred_check_branch
    %1505 = sbr.rel (0) target = $region61
  $region60: #{mlp_forward.1} parent=0 // pred_region
    _
  $region61: #{mlp_forward.1} parent=0 // pred_fallthru
    _

</llo_original>
